<compile_context>
chip_gen: v7x
topology: tpu7x:2x2x1
jax: 0.10.0
libtpu: 0.0.40
codegen_flags: <defaults>
</compile_context>

<pallas_src>
import functools

import jax
import jax.numpy as jnp
from jax import lax
from jax.experimental import pallas as pl
from jax.experimental.pallas import tpu as pltpu


# ------------------------------ kernel --------------------------------------


def _conv_stats_kernel(p_ref, w_ref, y_ref, sum_ref, ssq_ref, acc_ref, *,
                       rows_per_group):
    """Conv-as-matmul with K reduction; emit bf16 conv tile + channel stats.

    p_ref:   (tm, tk)   bf16 im2col patch block
    w_ref:   (tk, tn)   bf16 folded conv-weight block
    y_ref:   (tm, y_tn) bf16 conv output tile (y_tn = tn, or true Cout when a
                        single N tile covers all real channels)
    sum_ref: (8, tn)    f32 per-(row-tile, cout-tile) partial channel sums
    ssq_ref: (8, tn)    f32 partial channel sums of squares
    acc_ref: (tm, tn)   f32 VMEM accumulator scratch
    """
    k = pl.program_id(2)

    @pl.when(k == 0)
    def _init():
        acc_ref[...] = jnp.zeros_like(acc_ref)

    acc_ref[...] += jnp.dot(p_ref[...], w_ref[...],
                            preferred_element_type=jnp.float32)

    @pl.when(k == pl.num_programs(2) - 1)
    def _finalize():
        acc = acc_ref[...]
        # Store (possibly narrower than tn) bf16 conv output.
        y_ref[...] = acc[:, : y_ref.shape[-1]].astype(y_ref.dtype)
        # Sublane-grouped partials keep the stat store (8, 128)-tiled and make
        # the (i, j) grid axes safe to mark "parallel".
        yg = acc.reshape(rows_per_group, 8, acc.shape[-1])
        sum_ref[...] = jnp.sum(yg, axis=0)
        ssq_ref[...] = jnp.sum(yg * yg, axis=0)


# ------------------------------ tiling helpers -------------------------------


def _round_up(x, m):
    return ((x + m - 1) // m) * m


def _cdiv(a, b):
    return (a + b - 1) // b


def _vmem_capacity_bytes(default=64 * 1024 * 1024):
    try:
        info = pltpu.get_tpu_info()
        cap = int(getattr(info, "vmem_capacity_bytes", default))
    except Exception:
        cap = default
    return max(cap, 32 * 1024 * 1024)


def _block_bytes(tm, tk, tn, y_tn):
    """Double-buffered pipeline blocks + f32 accumulator + internal temps."""
    return (2 * tm * tk * 2          # patch blocks, bf16, 2 buffers
            + 2 * tk * tn * 2        # weight blocks, bf16, 2 buffers
            + 2 * tm * y_tn * 2      # conv-output blocks, bf16, 2 buffers
            + 2 * 2 * 8 * tn * 4     # sum/ssq partial blocks, f32
            + tm * tn * 4            # f32 accumulator scratch
            + 2 * tm * tn * 4)       # compiler-internal temps (dot result, y*y)


def _choose_tiling(M, Kdim, Cout):
    cap = _vmem_capacity_bytes()
    budget = (cap * 3) // 5          # conservative: v7x keeps >25 MiB headroom

    Cp = _round_up(Cout, 128)
    tn = 256 if (Cp % 256 == 0) else 128
    num_n = Cp // tn

    # K-reduction tiling: single step for moderate Kdim, else 512-wide blocks.
    if Kdim <= 1024:
        tk, Kp = Kdim, Kdim
    else:
        tk = 512
        Kp = _round_up(Kdim, tk)
    num_k = Kp // tk

    # HBM store width: skip 128-lane padding of the intermediate when a single
    # N tile covers all real channels (padding traffic >> masked-store cost).
    if num_n == 1:
        c_store, y_tn = Cout, Cout
    else:
        c_store, y_tn = Cp, tn

    # Row tile: prefer 1024 on big-VMEM chips / 512 otherwise, multiples of
    # 256 then 128 (never below 128 -- N/K are tiled instead).
    tm = 1024 if cap >= (96 << 20) else 512
    while tm > 256 and _block_bytes(tm, tk, tn, y_tn) > budget:
        tm -= 256
    while tm > 128 and _block_bytes(tm, tk, tn, y_tn) > budget:
        tm -= 128

    # Don't exceed what the (row-padded) problem needs; prefer >= 2 row tiles
    # so both v7x TensorCores get work on the parallel axes.
    m_min = _round_up(max(M, 8), 128)
    if tm >= m_min:
        tm = m_min if m_min <= 128 else _round_up(_cdiv(m_min, 2), 128)

    M_pad = _round_up(M, tm)
    num_m = M_pad // tm

    vmem_limit = int(min(cap - (4 << 20),
                         max(32 << 20,
                             _block_bytes(tm, tk, tn, y_tn) + (24 << 20))))
    return dict(tm=tm, tk=tk, tn=tn, Kp=Kp, Cp=Cp, num_m=num_m, num_n=num_n,
                num_k=num_k, M_pad=M_pad, c_store=c_store, y_tn=y_tn,
                vmem_limit=vmem_limit)


# ------------------------------ wrapper --------------------------------------


@functools.partial(jax.jit,
                   static_argnames=("kernel_size", "stride", "padding", "act"))
def conv_bn_act(x_nchw, weight, bias, gamma, beta, *,
                kernel_size=3, stride=1, padding=1, act=True, eps=1e-5):
    """ConvBnAct forward.  x_nchw: (B, Cin, H, W); weight: (Cout, Cin, K, K)."""
    del bias  # exactly cancelled by training-mode (batch-stat) BatchNorm
    # TODO(synk): dilation != 1 and groups != 1 are not implemented.
    B, Cin, H, W = x_nchw.shape
    Cout = weight.shape[0]
    K = kernel_size
    Ho = (H + 2 * padding - K) // stride + 1
    Wo = (W + 2 * padding - K) // stride + 1
    M = B * Ho * Wo
    Kdim = Cin * K * K

    t = _choose_tiling(M, Kdim, Cout)
    tm, tk, tn = t["tm"], t["tk"], t["tn"]
    Kp, Cp, M_pad = t["Kp"], t["Cp"], t["M_pad"]
    num_m, num_n, num_k = t["num_m"], t["num_n"], t["num_k"]
    c_store, y_tn = t["c_store"], t["y_tn"]

    # --- glue: im2col (NCHW -> NHWC -> bf16 patches) --------------------------
    # TODO(synk): fold the K*K im2col into the kernel (shifted-window reads of
    # the padded NHWC input over a (kh, kw) reduction axis) to avoid the K^2
    # HBM materialization entirely.
    x_nhwc = jnp.transpose(x_nchw, (0, 2, 3, 1)).astype(jnp.bfloat16)
    xp = jnp.pad(x_nhwc, ((0, 0), (padding, padding), (padding, padding), (0, 0)))
    cols = []
    for kh in range(K):
        for kw in range(K):
            cols.append(xp[:, kh:kh + Ho * stride:stride,
                           kw:kw + Wo * stride:stride, :])
    patches = jnp.concatenate(cols, axis=-1).reshape(M, Kdim)
    if M_pad != M or Kp != Kdim:
        # Zero rows/columns contribute exactly 0 to the matmul and to the batch
        # statistics (no conv bias), so the padding keeps the result exact.
        patches = jnp.pad(patches, ((0, M_pad - M), (0, Kp - Kdim)))

    # weight (Cout, Cin, kh, kw) -> (kh, kw, Cin, Cout) -> (Kp, Cp) bf16,
    # row order matches the patch column order ((kh, kw) outer, Cin inner).
    w_mat = jnp.transpose(weight.astype(jnp.float32), (2, 3, 1, 0)).reshape(Kdim, Cout)
    w_mat = jnp.pad(w_mat, ((0, Kp - Kdim), (0, Cp - Cout))).astype(jnp.bfloat16)

    cost = pl.CostEstimate(
        flops=2 * M_pad * Kp * Cp,
        transcendentals=0,
        bytes_accessed=(M_pad * Kp * 2 * num_n        # patches (re-read per j)
                        + Kp * Cp * 2 * num_m         # weights (re-read per i)
                        + M_pad * c_store * 2         # conv output write
                        + num_m * num_n * 8 * tn * 4 * 2))

    # --- Pallas kernel: conv matmul + per-tile partial batch statistics -------
    # TODO(synk): on v6e/v5e, sweeping pipeline_mode=pl.Buffered(3) on the
    # patches in_spec may hide exposed DMA for mem-bound shapes.
    y_flat, part_sum, part_ssq = pl.pallas_call(
        functools.partial(_conv_stats_kernel, rows_per_group=tm // 8),
        out_shape=(
            jax.ShapeDtypeStruct((M_pad, c_store), jnp.bfloat16),
            jax.ShapeDtypeStruct((num_m, num_n, 8, tn), jnp.float32),
            jax.ShapeDtypeStruct((num_m, num_n, 8, tn), jnp.float32),
        ),
        grid_spec=pltpu.PrefetchScalarGridSpec(
            num_scalar_prefetch=0,
            grid=(num_m, num_n, num_k),
            in_specs=[
                pl.BlockSpec((tm, tk), lambda i, j, k: (i, k)),
                pl.BlockSpec((tk, tn), lambda i, j, k: (k, j)),
            ],
            out_specs=[
                pl.BlockSpec((tm, y_tn), lambda i, j, k: (i, j)),
                pl.BlockSpec((None, None, 8, tn), lambda i, j, k: (i, j, 0, 0)),
                pl.BlockSpec((None, None, 8, tn), lambda i, j, k: (i, j, 0, 0)),
            ],
            scratch_shapes=[pltpu.VMEM((tm, tn), jnp.float32)],
        ),
        compiler_params=pltpu.CompilerParams(
            dimension_semantics=("parallel", "parallel", "arbitrary"),
            vmem_limit_bytes=t["vmem_limit"]),
        cost_estimate=cost,
    )(patches, w_mat)

    # --- fold batch-norm (training mode: batch mean / biased variance) --------
    ch_sum = jnp.sum(part_sum, axis=(0, 2)).reshape(num_n * tn)[:Cout]
    ch_ssq = jnp.sum(part_ssq, axis=(0, 2)).reshape(num_n * tn)[:Cout]
    mean = ch_sum / float(M)
    var = jnp.maximum(ch_ssq / float(M) - mean * mean, 0.0)     # biased variance
    # TODO(synk): switch to per-tile Welford (count, mean, M2) partials for very
    # large M to avoid E[y^2] - E[y]^2 cancellation.
    inv_std = lax.rsqrt(var + eps)
    scale = gamma.astype(jnp.float32) * inv_std
    shift = beta.astype(jnp.float32) - mean * scale

    # --- fused epilogue: one XLA pass over the tail ----------------------------
    # slice + cast + BN affine (+ ReLU) + NCHW transpose fuse into a single
    # read of the bf16 intermediate and a single write of the f32 output.
    y = y_flat[:M, :Cout].astype(jnp.float32)
    out = y * scale[None, :] + shift[None, :]
    if act:
        out = jnp.maximum(out, 0.0)
    out = out.reshape(B, Ho, Wo, Cout)
    return jnp.transpose(out, (0, 3, 1, 2))


# ------------------------------ reference ------------------------------------


def _reference(x, w, b, gamma, beta, *, stride, padding, eps=1e-5):
    y = lax.conv_general_dilated(
        x.astype(jnp.float32), w.astype(jnp.float32),
        window_strides=(stride, stride),
        padding=[(padding, padding), (padding, padding)],
        dimension_numbers=("NCHW", "OIHW", "NCHW"))
    y = y + b.reshape(1, -1, 1, 1)
    mean = jnp.mean(y, axis=(0, 2, 3), keepdims=True)
    var = jnp.mean((y - mean) ** 2, axis=(0, 2, 3), keepdims=True)   # biased
    y = (y - mean) * lax.rsqrt(var + eps)
    y = y * gamma.reshape(1, -1, 1, 1) + beta.reshape(1, -1, 1, 1)
    return jnp.maximum(y, 0.0)


# ------------------------------ main ------------------------------------------


if __name__ == "__main__":
    B, Cin, Cout, H, W, K = 2, 4, 8, 16, 16, 3
    stride, padding = 1, 1

    key = jax.random.PRNGKey(0)
    kx, kw, kb, kg, kbt = jax.random.split(key, 5)
    x = jax.random.normal(kx, (B, Cin, H, W), dtype=jnp.float32)
    weight = jax.random.normal(kw, (Cout, Cin, K, K), dtype=jnp.float32) * 0.1
    bias = jax.random.normal(kb, (Cout,), dtype=jnp.float32) * 0.1
    gamma = 1.0 + 0.1 * jax.random.normal(kg, (Cout,), dtype=jnp.float32)
    beta = 0.1 * jax.random.normal(kbt, (Cout,), dtype=jnp.float32)

    out = conv_bn_act(x, weight, bias, gamma, beta,
                      kernel_size=K, stride=stride, padding=padding, act=True)
    out = jax.block_until_ready(out)

    ref = _reference(x, weight, bias, gamma, beta, stride=stride, padding=padding)
    assert out.shape == (B, Cout, H, W), out.shape
    # bf16 MXU inputs + bf16 intermediate => compare at mixed-precision tolerance.
    max_err = float(jnp.max(jnp.abs(out - ref)))
    assert jnp.allclose(out, ref, atol=5e-2, rtol=5e-2), max_err

    print("KERNEL_OK")
</pallas_src>

<mosaic_0001>
module attributes {stable_mosaic.version = 11 : i64} {
  func.func @_conv_stats_kernel(%arg0: i32, %arg1: i32, %arg2: i32, %arg3: memref<256x36xbf16, #tpu.memory_space<vmem>>, %arg4: memref<36x128xbf16, #tpu.memory_space<vmem>>, %arg5: memref<256x8xbf16, #tpu.memory_space<vmem>>, %arg6: memref<1x1x8x128xf32, #tpu.memory_space<vmem>>, %arg7: memref<1x1x8x128xf32, #tpu.memory_space<vmem>>, %arg8: memref<256x128xf32, #tpu.memory_space<vmem>>) attributes {dimension_semantics = [#tpu.dimension_semantics<parallel>, #tpu.dimension_semantics<parallel>, #tpu.dimension_semantics<arbitrary>], iteration_bounds = array<i64: 2, 1, 1>, scalar_prefetch = 0 : i64, scratch_operands = 1 : i64, tpu.core_type = #tpu.core_type<tc>, window_params = [{transform_indices = @transform_0, window_bounds = array<i64: 256, 36>}, {transform_indices = @transform_1, window_bounds = array<i64: 36, 128>}, {transform_indices = @transform_2, window_bounds = array<i64: 256, 8>}, {transform_indices = @transform_3, window_bounds = array<i64: 1, 1, 8, 128>}, {transform_indices = @transform_4, window_bounds = array<i64: 1, 1, 8, 128>}]} {
    %c0_i32 = arith.constant 0 : i32
    %0 = arith.cmpi eq, %arg2, %c0_i32 : i32
    %1 = arith.extui %0 : i1 to i32
    %c0_i32_0 = arith.constant 0 : i32
    %2 = arith.cmpi ne, %1, %c0_i32_0 : i32
    scf.if %2 {
      %cst_10 = arith.constant 0.000000e+00 : f32
      %12 = vector.broadcast %cst_10 : f32 to vector<256x128xf32>
      %c0_11 = arith.constant 0 : index
      %c0_12 = arith.constant 0 : index
      %13 = vector.load %arg8[%c0_11, %c0_12] : memref<256x128xf32, #tpu.memory_space<vmem>>, vector<256x128xf32>
      tpu.vector_store %arg8[%c0_11, %c0_12], %12 {strides = array<i32>} : memref<256x128xf32, #tpu.memory_space<vmem>>, vector<256x128xf32>,
    } else {
    }
    %c0 = arith.constant 0 : index
    %c0_1 = arith.constant 0 : index
    %3 = vector.load %arg8[%c0, %c0_1] : memref<256x128xf32, #tpu.memory_space<vmem>>, vector<256x128xf32>
    %c0_2 = arith.constant 0 : index
    %c0_3 = arith.constant 0 : index
    %4 = vector.load %arg3[%c0_2, %c0_3] : memref<256x36xbf16, #tpu.memory_space<vmem>>, vector<256x36xbf16>
    %c0_4 = arith.constant 0 : index
    %c0_5 = arith.constant 0 : index
    %5 = vector.load %arg4[%c0_4, %c0_5] : memref<36x128xbf16, #tpu.memory_space<vmem>>, vector<36x128xbf16>
    %cst = arith.constant dense<0.000000e+00> : vector<256x128xf32>
    %6 = tpu.matmul %4, %5, %cst {dimension_numbers = #tpu.dot_dimension_numbers<[1], [0], [0], [1], [0, 0, 1, 1], [], []>} : vector<256x36xbf16>, vector<36x128xbf16>, vector<256x128xf32> -> vector<256x128xf32>
    %7 = arith.addf %3, %6 : vector<256x128xf32>
    %c0_6 = arith.constant 0 : index
    %c0_7 = arith.constant 0 : index
    %8 = vector.load %arg8[%c0_6, %c0_7] : memref<256x128xf32, #tpu.memory_space<vmem>>, vector<256x128xf32>
    tpu.vector_store %arg8[%c0_6, %c0_7], %7 {strides = array<i32>} : memref<256x128xf32, #tpu.memory_space<vmem>>, vector<256x128xf32>,
    %c0_i32_8 = arith.constant 0 : i32
    %9 = arith.cmpi eq, %arg2, %c0_i32_8 : i32
    %10 = arith.extui %9 : i1 to i32
    %c0_i32_9 = arith.constant 0 : i32
    %11 = arith.cmpi ne, %10, %c0_i32_9 : i32
    scf.if %11 {
      %c0_10 = arith.constant 0 : index
      %c0_11 = arith.constant 0 : index
      %12 = vector.load %arg8[%c0_10, %c0_11] : memref<256x128xf32, #tpu.memory_space<vmem>>, vector<256x128xf32>
      %13 = vector.extract_strided_slice %12 {offsets = [0, 0], sizes = [256, 8], strides = [1, 1]} : vector<256x128xf32> to vector<256x8xf32>
      %14 = arith.truncf %13 : vector<256x8xf32> to vector<256x8xbf16>
      %c0_12 = arith.constant 0 : index
      %c0_13 = arith.constant 0 : index
      %15 = vector.load %arg5[%c0_12, %c0_13] : memref<256x8xbf16, #tpu.memory_space<vmem>>, vector<256x8xbf16>
      tpu.vector_store %arg5[%c0_12, %c0_13], %14 {strides = array<i32>} : memref<256x8xbf16, #tpu.memory_space<vmem>>, vector<256x8xbf16>,
      %16 = vector.shape_cast %12 : vector<256x128xf32> to vector<32x8x128xf32>
      %cst_14 = arith.constant dense<0.000000e+00> : vector<8x128xf32>
      %17 = vector.multi_reduction <add>, %16, %cst_14 [0] : vector<32x8x128xf32> to vector<8x128xf32>
      %c0_15 = arith.constant 0 : index
      %c0_16 = arith.constant 0 : index
      %c0_17 = arith.constant 0 : index
      %c0_18 = arith.constant 0 : index
      %18 = vector.load %arg6[%c0_15, %c0_16, %c0_17, %c0_18] : memref<1x1x8x128xf32, #tpu.memory_space<vmem>>, vector<1x1x8x128xf32>
      %19 = vector.shape_cast %18 : vector<1x1x8x128xf32> to vector<8x128xf32>
      %20 = vector.shape_cast %17 : vector<8x128xf32> to vector<1x1x8x128xf32>
      tpu.vector_store %arg6[%c0_15, %c0_16, %c0_17, %c0_18], %20 {strides = array<i32>} : memref<1x1x8x128xf32, #tpu.memory_space<vmem>>, vector<1x1x8x128xf32>,
      %21 = arith.mulf %16, %16 : vector<32x8x128xf32>
      %cst_19 = arith.constant dense<0.000000e+00> : vector<8x128xf32>
      %22 = vector.multi_reduction <add>, %21, %cst_19 [0] : vector<32x8x128xf32> to vector<8x128xf32>
      %c0_20 = arith.constant 0 : index
      %c0_21 = arith.constant 0 : index
      %c0_22 = arith.constant 0 : index
      %c0_23 = arith.constant 0 : index
      %23 = vector.load %arg7[%c0_20, %c0_21, %c0_22, %c0_23] : memref<1x1x8x128xf32, #tpu.memory_space<vmem>>, vector<1x1x8x128xf32>
      %24 = vector.shape_cast %23 : vector<1x1x8x128xf32> to vector<8x128xf32>
      %25 = vector.shape_cast %22 : vector<8x128xf32> to vector<1x1x8x128xf32>
      tpu.vector_store %arg7[%c0_20, %c0_21, %c0_22, %c0_23], %25 {strides = array<i32>} : memref<1x1x8x128xf32, #tpu.memory_space<vmem>>, vector<1x1x8x128xf32>,
    } else {
    }
    return
  }
  func.func @transform_0(%arg0: i32, %arg1: i32, %arg2: i32) -> (i32, i32) {
    %c0_i32 = arith.constant 0 : i32
    return %arg0, %arg2 : i32, i32
  }
  func.func @transform_1(%arg0: i32, %arg1: i32, %arg2: i32) -> (i32, i32) {
    %c0_i32 = arith.constant 0 : i32
    return %arg2, %arg1 : i32, i32
  }
  func.func @transform_2(%arg0: i32, %arg1: i32, %arg2: i32) -> (i32, i32) {
    %c0_i32 = arith.constant 0 : i32
    return %arg0, %arg1 : i32, i32
  }
  func.func @transform_3(%arg0: i32, %arg1: i32, %arg2: i32) -> (i32, i32, i32, i32) {
    %c0_i32 = arith.constant 0 : i32
    %c0_i32_0 = arith.constant 0 : i32
    %c0_i32_1 = arith.constant 0 : i32
    return %arg0, %arg1, %c0_i32, %c0_i32_0 : i32, i32, i32, i32
  }
  func.func @transform_4(%arg0: i32, %arg1: i32, %arg2: i32) -> (i32, i32, i32, i32) {
    %c0_i32 = arith.constant 0 : i32
    %c0_i32_0 = arith.constant 0 : i32
    %c0_i32_1 = arith.constant 0 : i32
    return %arg0, %arg1, %c0_i32, %c0_i32_0 : i32, i32, i32, i32
  }
}

</mosaic_0001>

<llo_original>
// kernel: conv_bn_act.1
$region0: #{conv_bn_act.1}
  #allocation0 [shape = 'u32[]', space=smem, size = 0x4, offset = 0x4, fixed_abs, tag = 'smem constant byte address 0x4 - core index']
  #allocation1 [shape = 'u32[144,128]{1,0:T(1,128)}', space=vmem, size = 0x12000, scoped, tag = 'internal scratch']
  #allocation2 [shape = 'f32[256,128]{1,0:T(8,128)}', space=vmem, size = 0x20000, scoped, tag = 'scratch operand']
  %s0 = inlined_call_operand.vmem [shape: bf16[512,36], index: 0, kind: input, shape index: {}]
  %s1 = inlined_call_operand.vmem [shape: bf16[36,128], index: 1, kind: input, shape index: {}]
  %s2 = inlined_call_operand.vmem [shape: bf16[512,8], index: 2, kind: output, shape index: {0}]
  %s3 = inlined_call_operand.vmem [shape: f32[2,1,8,128], index: 3, kind: output, shape index: {1}]
  %s4 = inlined_call_operand.vmem [shape: f32[2,1,8,128], index: 4, kind: output, shape index: {2}]
  %5 = xla_tuple %s2, %s3, %s4
  %s6 = sld [smem:[#allocation0]]
  $region65: #{conv_bn_act.1} parent=0
    _
  %s8 = ssub.s32 1, %s6
  %s9 = scalar_select 0, %s8, %s6
  loop: start=0, step=1, limit=4
  $region2: #{conv_bn_act.1} parent=0 // loop_pre_header
    _
  $region3: #{conv_bn_act.1} parent=0 // loop_header
    %s11 = sphi 0, %s15
    %p12 = scmp.ge.s32.totalorder %s11, 4
    %s18 = sphi 0, %s37
    %s19 = sphi 0, %s33
    %s20 = sphi 0, %s29
    %s21 = sphi 0, %s18
    %s22 = sphi 0, %s19
    %s23 = sphi 0, %s20
    %s24 = sphi 0, %s21
    %s25 = sphi 0, %s22
    %s26 = sphi 0, %s23
    %s42 = sphi 0, %s44
    %s45 = sphi 0, %s42
    %s46 = sphi 0, %s45
    %s62 = sphi 0, %s46
    %s70 = sphi 0, %s72
    %s73 = sphi 0, %s70
    %s74 = sphi 0, %s73
    %s90 = sphi 0, %s74
    %s98 = sphi 0, %s100
    %s101 = sphi 0, %s98
    %s102 = sphi 0, %s101
    %s118 = sphi 0, %s102
    %s126 = sphi 0, %s128
    %s129 = sphi 0, %s126
    %s130 = sphi 0, %s129
    %s146 = sphi 0, %s130
    %s154 = sphi 0, %s156
    %s157 = sphi 0, %s154
    %s158 = sphi 0, %s157
    %s174 = sphi 0, %s158
  $region4: #{conv_bn_act.1} parent=0 // loop_header_branch
    %14 = sbr.rel (%p12) target = $region8
  $region5: #{conv_bn_act.1} parent=0 // loop_body
    %s16 = ssub.s32 %s11, 1
    %s17 = ssub.s32 %s11, 2
    %s27 = sadd.s32 1, %s20
    %p28 = scmp.ge.s32.totalorder %s27, 1
    %s29 = scalar_select %p28, 0, %s27
    %s30 = sadd.s32 1, %s19
    %s31 = scalar_select %p28, %s30, %s19
    %p32 = scmp.ge.s32.totalorder %s31, 1
    %s33 = scalar_select %p32, 0, %s31
    %s34 = sadd.s32 1, %s18
    %s35 = scalar_select %p32, %s34, %s18
    %p36 = scmp.ge.s32.totalorder %s35, 2
    %s37 = scalar_select %p36, 0, %s35
    %s38 = ssub.s32 %s18, %s37
    %s39 = ssub.s32 %s20, %s29
    %s40 = sor.u32 %s38, %s39
    %p41 = scmp.eq.s32.totalorder %s40, 0
    %s43 = sadd.s32 %s42, 1
    %s44 = scalar_select %p41, %s42, %s43
    %p47 = pneg %p41
    %p48 = scmp.eq.s32.totalorder %s11, 1
    %p49 = por %p47, %p48
    %p50 = scmp.ne.s32.totalorder %s42, %s45
    %p51 = scmp.eq.s32.totalorder %s11, 0
    %p52 = por %p50, %p51
    %p53 = scmp.ne.s32.totalorder %s42, %s45
    %p54 = scmp.eq.s32.totalorder %s16, 1
    %p55 = por %p53, %p54
    %p56 = scmp.ne.s32.totalorder %s45, %s46
    %p57 = scmp.eq.s32.totalorder %s16, 0
    %p58 = por %p56, %p57
    %p59 = scmp.ne.s32.totalorder %s45, %s46
    %p60 = scmp.eq.s32.totalorder %s17, 1
    %p61 = por %p59, %p60
    %p63 = scmp.ne.s32.totalorder %s46, %s62
    %p64 = scmp.eq.s32.totalorder %s17, 0
    %p65 = por %p63, %p64
    %s66 = ssub.s32 %s20, %s29
    %s67 = ssub.s32 %s19, %s33
    %s68 = sor.u32 %s66, %s67
    %p69 = scmp.eq.s32.totalorder %s68, 0
    %s71 = sadd.s32 %s70, 1
    %s72 = scalar_select %p69, %s70, %s71
    %p75 = pneg %p69
    %p76 = scmp.eq.s32.totalorder %s11, 1
    %p77 = por %p75, %p76
    %p78 = scmp.ne.s32.totalorder %s70, %s73
    %p79 = scmp.eq.s32.totalorder %s11, 0
    %p80 = por %p78, %p79
    %p81 = scmp.ne.s32.totalorder %s70, %s73
    %p82 = scmp.eq.s32.totalorder %s16, 1
    %p83 = por %p81, %p82
    %p84 = scmp.ne.s32.totalorder %s73, %s74
    %p85 = scmp.eq.s32.totalorder %s16, 0
    %p86 = por %p84, %p85
    %p87 = scmp.ne.s32.totalorder %s73, %s74
    %p88 = scmp.eq.s32.totalorder %s17, 1
    %p89 = por %p87, %p88
    %p91 = scmp.ne.s32.totalorder %s74, %s90
    %p92 = scmp.eq.s32.totalorder %s17, 0
    %p93 = por %p91, %p92
    %s94 = ssub.s32 %s18, %s37
    %s95 = ssub.s32 %s19, %s33
    %s96 = sor.u32 %s94, %s95
    %p97 = scmp.eq.s32.totalorder %s96, 0
    %s99 = sadd.s32 %s98, 1
    %s100 = scalar_select %p97, %s98, %s99
    %p103 = pneg %p97
    %p104 = scmp.eq.s32.totalorder %s11, 1
    %p105 = por %p103, %p104
    %p106 = scmp.ne.s32.totalorder %s98, %s101
    %p107 = scmp.eq.s32.totalorder %s11, 0
    %p108 = por %p106, %p107
    %p109 = scmp.ne.s32.totalorder %s98, %s101
    %p110 = scmp.eq.s32.totalorder %s16, 1
    %p111 = por %p109, %p110
    %p112 = scmp.ne.s32.totalorder %s101, %s102
    %p113 = scmp.eq.s32.totalorder %s16, 0
    %p114 = por %p112, %p113
    %p115 = scmp.ne.s32.totalorder %s101, %s102
    %p116 = scmp.eq.s32.totalorder %s17, 1
    %p117 = por %p115, %p116
    %p119 = scmp.ne.s32.totalorder %s102, %s118
    %p120 = scmp.eq.s32.totalorder %s17, 0
    %p121 = por %p119, %p120
    %s122 = ssub.s32 %s18, %s37
    %s123 = ssub.s32 %s19, %s33
    %s124 = sor.u32 %s122, %s123
    %p125 = scmp.eq.s32.totalorder %s124, 0
    %s127 = sadd.s32 %s126, 1
    %s128 = scalar_select %p125, %s126, %s127
    %p131 = pneg %p125
    %p132 = scmp.eq.s32.totalorder %s11, 1
    %p133 = por %p131, %p132
    %p134 = scmp.ne.s32.totalorder %s126, %s129
    %p135 = scmp.eq.s32.totalorder %s11, 0
    %p136 = por %p134, %p135
    %p137 = scmp.ne.s32.totalorder %s126, %s129
    %p138 = scmp.eq.s32.totalorder %s16, 1
    %p139 = por %p137, %p138
    %p140 = scmp.ne.s32.totalorder %s129, %s130
    %p141 = scmp.eq.s32.totalorder %s16, 0
    %p142 = por %p140, %p141
    %p143 = scmp.ne.s32.totalorder %s129, %s130
    %p144 = scmp.eq.s32.totalorder %s17, 1
    %p145 = por %p143, %p144
    %p147 = scmp.ne.s32.totalorder %s130, %s146
    %p148 = scmp.eq.s32.totalorder %s17, 0
    %p149 = por %p147, %p148
    %s150 = ssub.s32 %s18, %s37
    %s151 = ssub.s32 %s19, %s33
    %s152 = sor.u32 %s150, %s151
    %p153 = scmp.eq.s32.totalorder %s152, 0
    %s155 = sadd.s32 %s154, 1
    %s156 = scalar_select %p153, %s154, %s155
    %p159 = pneg %p153
    %p160 = scmp.eq.s32.totalorder %s11, 1
    %p161 = por %p159, %p160
    %p162 = scmp.ne.s32.totalorder %s154, %s157
    %p163 = scmp.eq.s32.totalorder %s11, 0
    %p164 = por %p162, %p163
    %p165 = scmp.ne.s32.totalorder %s154, %s157
    %p166 = scmp.eq.s32.totalorder %s16, 1
    %p167 = por %p165, %p166
    %p168 = scmp.ne.s32.totalorder %s157, %s158
    %p169 = scmp.eq.s32.totalorder %s16, 0
    %p170 = por %p168, %p169
    %p171 = scmp.ne.s32.totalorder %s157, %s158
    %p172 = scmp.eq.s32.totalorder %s17, 1
    %p173 = por %p171, %p172
    %p175 = scmp.ne.s32.totalorder %s158, %s174
    %p176 = scmp.eq.s32.totalorder %s17, 0
    %p177 = por %p175, %p176
    %p178 = scmp.le.s32.totalorder 1, %s11
    %p179 = scmp.lt.s32.totalorder %s11, 3
    %p180 = pnand %p178, %p179
    %p181 = pneg %p180
    // Predicated region
    $region9: #{conv_bn_act.1} parent=5 // pred_check
      _
    $region10: #{conv_bn_act.1} parent=5 // pred_check_branch
      %183 = sbr.rel (%p180) target = $region12
    $region11: #{conv_bn_act.1} parent=5 // pred_region
      %s184 = ssub.s32 %s11, 1
      // Predicated region
      $region13: #{conv_bn_act.1} parent=11 // pred_check
        %p185 = pneg %p86
      $region14: #{conv_bn_act.1} parent=11 // pred_check_branch
        %187 = sbr.rel (%p185) target = $region16
      $region15: #{conv_bn_act.1} parent=11 // pred_region
        %s188 = smul.u32 5, %s23
        %p189 = scmp.lt.s32.totalorder %s188, 4
        %s190 = scalar_select %p189, %s188, 4
        %p191 = scmp.lt.s32.totalorder %s22, 0
        %s192 = scalar_select %p191, %s22, 0
        %s193 = sadd.s32 %s192, %s190
        %s194 = smul.addr %s193, 4
        %s195 = scalar_lea.vmem %s1, %s194
        %s196 = smul.u32 5, %s23
      $region16: #{conv_bn_act.1} parent=11 // pred_fallthru
        _
    $region12: #{conv_bn_act.1} parent=5 // pred_fallthru
      _
    %p197 = scmp.lt.s32.totalorder %s11, 2
    // Predicated region
    $region17: #{conv_bn_act.1} parent=5 // pred_check
      %p198 = pneg %p197
    $region18: #{conv_bn_act.1} parent=5 // pred_check_branch
      %200 = sbr.rel (%p198) target = $region20
    $region19: #{conv_bn_act.1} parent=5 // pred_region
      // Predicated region
      $region21: #{conv_bn_act.1} parent=19 // pred_check
        %p201 = pneg %p52
      $region22: #{conv_bn_act.1} parent=19 // pred_check_branch
        %203 = sbr.rel (%p201) target = $region24
      $region23: #{conv_bn_act.1} parent=19 // pred_region
        %s204 = smul.u32 32, %s18
        %p205 = scmp.lt.s32.totalorder %s204, 63
        %s206 = scalar_select %p205, %s204, 63
        %p207 = scmp.lt.s32.totalorder %s20, 0
        %s208 = scalar_select %p207, %s20, 0
        %s209 = sadd.s32 %s208, %s206
        %s210 = smul.addr %s209, 4
        %s211 = scalar_lea.vmem %s0, %s210
        %s212 = smul.u32 32, %s18
      $region24: #{conv_bn_act.1} parent=19 // pred_fallthru
        _
    $region20: #{conv_bn_act.1} parent=5 // pred_fallthru
      _
    %p213 = scmp.le.s32.totalorder 1, %s11
    %p214 = scmp.lt.s32.totalorder %s11, 3
    %p215 = pnand %p213, %p214
    %p216 = pneg %p215
    // Predicated region
    $region25: #{conv_bn_act.1} parent=5 // pred_check
      _
    $region26: #{conv_bn_act.1} parent=5 // pred_check_branch
      %218 = sbr.rel (%p215) target = $region28
    $region27: #{conv_bn_act.1} parent=5 // pred_region
      %s219 = ssub.s32 %s11, 1
      %s220 = smul.u32 32, %s21
      %p221 = scmp.lt.s32.totalorder %s220, 63
      %s222 = scalar_select %p221, %s220, 63
      %p223 = scmp.lt.s32.totalorder %s23, 0
      %s224 = scalar_select %p223, %s23, 0
      %s225 = sadd.s32 %s224, %s222
      %s226 = smul.addr %s225, 4
      %s227 = scalar_lea.vmem %s0, %s226
      %p228 = pneg %p58
      %p229 = pneg %p55
      %s230 = smul.u32 5, %s23
      %p231 = scmp.lt.s32.totalorder %s230, 4
      %s232 = scalar_select %p231, %s230, 4
      %p233 = scmp.lt.s32.totalorder %s22, 0
      %s234 = scalar_select %p233, %s22, 0
      %s235 = sadd.s32 %s234, %s232
      %s236 = smul.addr %s235, 4
      %s237 = scalar_lea.vmem %s1, %s236
      %p238 = pneg %p86
      %p239 = pneg %p83
      %p240 = pneg %p114
      %p241 = pneg %p111
      %s242 = smul.u32 32, %s21
      %p243 = scmp.lt.s32.totalorder %s242, 63
      %s244 = scalar_select %p243, %s242, 63
      %p245 = scmp.lt.s32.totalorder %s22, 0
      %s246 = scalar_select %p245, %s22, 0
      %s247 = sadd.s32 %s246, %s244
      %s248 = smul.addr %s247, 4
      %s249 = scalar_lea.vmem %s2, %s248
      %p250 = pneg %p142
      %p251 = pneg %p139
      %p252 = scmp.lt.s32.totalorder %s21, 1
      %s253 = scalar_select %p252, %s21, 1
      %p254 = scmp.lt.s32.totalorder %s22, 0
      %s255 = scalar_select %p254, %s22, 0
      %s256 = sadd.s32 %s255, %s253
      %s257 = smul.addr %s256, 8
      %s258 = scalar_lea.vmem %s3, %s257
      %p259 = pneg %p170
      %p260 = pneg %p167
      %p261 = scmp.lt.s32.totalorder %s21, 1
      %s262 = scalar_select %p261, %s21, 1
      %p263 = scmp.lt.s32.totalorder %s22, 0
      %s264 = scalar_select %p263, %s22, 0
      %s265 = sadd.s32 %s264, %s262
      %s266 = smul.addr %s265, 8
      %s267 = scalar_lea.vmem %s4, %s266
      %s268 = smul.u32 32, %s21
      %p269 = scmp.lt.s32.totalorder %s268, 63
      %s270 = scalar_select %p269, %s268, 63
      %p271 = scmp.lt.s32.totalorder %s23, 0
      %s272 = scalar_select %p271, %s23, 0
      %s273 = sadd.s32 %s272, %s270
      %s274 = smul.addr %s273, 4
      %s275 = scalar_lea.vmem %s0, %s274
      %s276 = smul.u32 32, %s21
      %s277 = smul.u32 5, %s23
      %p278 = scmp.lt.s32.totalorder %s277, 4
      %s279 = scalar_select %p278, %s277, 4
      %p280 = scmp.lt.s32.totalorder %s22, 0
      %s281 = scalar_select %p280, %s22, 0
      %s282 = sadd.s32 %s281, %s279
      %s283 = smul.addr %s282, 4
      %s284 = scalar_lea.vmem %s1, %s283
      %s285 = smul.u32 5, %s23
      %s286 = smul.u32 32, %s21
      %p287 = scmp.lt.s32.totalorder %s286, 63
      %s288 = scalar_select %p287, %s286, 63
      %p289 = scmp.lt.s32.totalorder %s22, 0
      %s290 = scalar_select %p289, %s22, 0
      %s291 = sadd.s32 %s290, %s288
      %s292 = smul.addr %s291, 4
      %s293 = scalar_lea.vmem %s2, %s292
      %s294 = smul.u32 32, %s21
      %p295 = scmp.lt.s32.totalorder %s21, 1
      %s296 = scalar_select %p295, %s21, 1
      %p297 = scmp.lt.s32.totalorder %s22, 0
      %s298 = scalar_select %p297, %s22, 0
      %s299 = sadd.s32 %s298, %s296
      %s300 = smul.addr %s299, 8
      %s301 = scalar_lea.vmem %s3, %s300
      %p302 = scmp.lt.s32.totalorder %s21, 1
      %s303 = scalar_select %p302, %s21, 1
      %p304 = scmp.lt.s32.totalorder %s22, 0
      %s305 = scalar_select %p304, %s22, 0
      %s306 = sadd.s32 %s305, %s303
      %s307 = smul.addr %s306, 8
      %s308 = scalar_lea.vmem %s4, %s307
      %p310 = scmp.eq.s32.totalorder %s23, 0
      // Predicated region
      $region29: #{conv_bn_act.1} parent=27 // pred_check
        %p311 = pneg %p310
      $region30: #{conv_bn_act.1} parent=27 // pred_check_branch
        %313 = sbr.rel (%p311) target = $region32
      $region31: #{conv_bn_act.1} parent=27 // pred_region
        %314 = vst [vmem:[#allocation2] sm:$0xff] 0.0
        %315 = vst [vmem:[#allocation2 + $0x8] sm:$0xff] 0.0
        %316 = vst [vmem:[#allocation2 + $0x10] sm:$0xff] 0.0
        %317 = vst [vmem:[#allocation2 + $0x18] sm:$0xff] 0.0
        %318 = vst [vmem:[#allocation2 + $0x20] sm:$0xff] 0.0
        %319 = vst [vmem:[#allocation2 + $0x28] sm:$0xff] 0.0
        %320 = vst [vmem:[#allocation2 + $0x30] sm:$0xff] 0.0
        %321 = vst [vmem:[#allocation2 + $0x38] sm:$0xff] 0.0
        %322 = vst [vmem:[#allocation2 + $0x40] sm:$0xff] 0.0
        %323 = vst [vmem:[#allocation2 + $0x48] sm:$0xff] 0.0
        %324 = vst [vmem:[#allocation2 + $0x50] sm:$0xff] 0.0
        %325 = vst [vmem:[#allocation2 + $0x58] sm:$0xff] 0.0
        %326 = vst [vmem:[#allocation2 + $0x60] sm:$0xff] 0.0
        %327 = vst [vmem:[#allocation2 + $0x68] sm:$0xff] 0.0
        %328 = vst [vmem:[#allocation2 + $0x70] sm:$0xff] 0.0
        %329 = vst [vmem:[#allocation2 + $0x78] sm:$0xff] 0.0
        %330 = vst [vmem:[#allocation2 + $0x80] sm:$0xff] 0.0
        %331 = vst [vmem:[#allocation2 + $0x88] sm:$0xff] 0.0
        %332 = vst [vmem:[#allocation2 + $0x90] sm:$0xff] 0.0
        %333 = vst [vmem:[#allocation2 + $0x98] sm:$0xff] 0.0
        %334 = vst [vmem:[#allocation2 + $0xa0] sm:$0xff] 0.0
        %335 = vst [vmem:[#allocation2 + $0xa8] sm:$0xff] 0.0
        %336 = vst [vmem:[#allocation2 + $0xb0] sm:$0xff] 0.0
        %337 = vst [vmem:[#allocation2 + $0xb8] sm:$0xff] 0.0
        %338 = vst [vmem:[#allocation2 + $0xc0] sm:$0xff] 0.0
        %339 = vst [vmem:[#allocation2 + $0xc8] sm:$0xff] 0.0
        %340 = vst [vmem:[#allocation2 + $0xd0] sm:$0xff] 0.0
        %341 = vst [vmem:[#allocation2 + $0xd8] sm:$0xff] 0.0
        %342 = vst [vmem:[#allocation2 + $0xe0] sm:$0xff] 0.0
        %343 = vst [vmem:[#allocation2 + $0xe8] sm:$0xff] 0.0
        %344 = vst [vmem:[#allocation2 + $0xf0] sm:$0xff] 0.0
        %345 = vst [vmem:[#allocation2 + $0xf8] sm:$0xff] 0.0
      $region32: #{conv_bn_act.1} parent=27 // pred_fallthru
        _
      %v346 = vld [vmem:[#allocation2] sm:$0xff]
      %v347 = vld [vmem:[#allocation2 + $0x8] sm:$0xff]
      %v348 = vld [vmem:[#allocation2 + $0x10] sm:$0xff]
      %v349 = vld [vmem:[#allocation2 + $0x18] sm:$0xff]
      %v350 = vld [vmem:[#allocation2 + $0x20] sm:$0xff]
      %v351 = vld [vmem:[#allocation2 + $0x28] sm:$0xff]
      %v352 = vld [vmem:[#allocation2 + $0x30] sm:$0xff]
      %v353 = vld [vmem:[#allocation2 + $0x38] sm:$0xff]
      %v354 = vld [vmem:[#allocation2 + $0x40] sm:$0xff]
      %v355 = vld [vmem:[#allocation2 + $0x48] sm:$0xff]
      %v356 = vld [vmem:[#allocation2 + $0x50] sm:$0xff]
      %v357 = vld [vmem:[#allocation2 + $0x58] sm:$0xff]
      %v358 = vld [vmem:[#allocation2 + $0x60] sm:$0xff]
      %v359 = vld [vmem:[#allocation2 + $0x68] sm:$0xff]
      %v360 = vld [vmem:[#allocation2 + $0x70] sm:$0xff]
      %v361 = vld [vmem:[#allocation2 + $0x78] sm:$0xff]
      %v362 = vld [vmem:[#allocation2 + $0x80] sm:$0xff]
      %v363 = vld [vmem:[#allocation2 + $0x88] sm:$0xff]
      %v364 = vld [vmem:[#allocation2 + $0x90] sm:$0xff]
      %v365 = vld [vmem:[#allocation2 + $0x98] sm:$0xff]
      %v366 = vld [vmem:[#allocation2 + $0xa0] sm:$0xff]
      %v367 = vld [vmem:[#allocation2 + $0xa8] sm:$0xff]
      %v368 = vld [vmem:[#allocation2 + $0xb0] sm:$0xff]
      %v369 = vld [vmem:[#allocation2 + $0xb8] sm:$0xff]
      %v370 = vld [vmem:[#allocation2 + $0xc0] sm:$0xff]
      %v371 = vld [vmem:[#allocation2 + $0xc8] sm:$0xff]
      %v372 = vld [vmem:[#allocation2 + $0xd0] sm:$0xff]
      %v373 = vld [vmem:[#allocation2 + $0xd8] sm:$0xff]
      %v374 = vld [vmem:[#allocation2 + $0xe0] sm:$0xff]
      %v375 = vld [vmem:[#allocation2 + $0xe8] sm:$0xff]
      %v376 = vld [vmem:[#allocation2 + $0xf0] sm:$0xff]
      %v377 = vld [vmem:[#allocation2 + $0xf8] sm:$0xff]
      %v378 = vld [vmem:[%s275] sm:$0xf]
      %v379 = vld [vmem:[%s275 + $0x4] sm:$0xf]
      %v380 = vld [vmem:[%s275 + $0x8] sm:$0xf]
      %v381 = vld [vmem:[%s275 + $0xc] sm:$0xf]
      %v382 = vld [vmem:[%s275 + $0x10] sm:$0xf]
      %v383 = vld [vmem:[%s275 + $0x14] sm:$0xf]
      %v384 = vld [vmem:[%s275 + $0x18] sm:$0xf]
      %v385 = vld [vmem:[%s275 + $0x1c] sm:$0xf]
      %v386 = vld [vmem:[%s275 + $0x20] sm:$0xf]
      %v387 = vld [vmem:[%s275 + $0x24] sm:$0xf]
      %v388 = vld [vmem:[%s275 + $0x28] sm:$0xf]
      %v389 = vld [vmem:[%s275 + $0x2c] sm:$0xf]
      %v390 = vld [vmem:[%s275 + $0x30] sm:$0xf]
      %v391 = vld [vmem:[%s275 + $0x34] sm:$0xf]
      %v392 = vld [vmem:[%s275 + $0x38] sm:$0xf]
      %v393 = vld [vmem:[%s275 + $0x3c] sm:$0xf]
      %v394 = vld [vmem:[%s275 + $0x40] sm:$0xf]
      %v395 = vld [vmem:[%s275 + $0x44] sm:$0xf]
      %v396 = vld [vmem:[%s275 + $0x48] sm:$0xf]
      %v397 = vld [vmem:[%s275 + $0x4c] sm:$0xf]
      %v398 = vld [vmem:[%s275 + $0x50] sm:$0xf]
      %v399 = vld [vmem:[%s275 + $0x54] sm:$0xf]
      %v400 = vld [vmem:[%s275 + $0x58] sm:$0xf]
      %v401 = vld [vmem:[%s275 + $0x5c] sm:$0xf]
      %v402 = vld [vmem:[%s275 + $0x60] sm:$0xf]
      %v403 = vld [vmem:[%s275 + $0x64] sm:$0xf]
      %v404 = vld [vmem:[%s275 + $0x68] sm:$0xf]
      %v405 = vld [vmem:[%s275 + $0x6c] sm:$0xf]
      %v406 = vld [vmem:[%s275 + $0x70] sm:$0xf]
      %v407 = vld [vmem:[%s275 + $0x74] sm:$0xf]
      %v408 = vld [vmem:[%s275 + $0x78] sm:$0xf]
      %v409 = vld [vmem:[%s275 + $0x7c] sm:$0xf]
      %v410 = vld [vmem:[%s284] sm:$0xf]
      %v411 = vld [vmem:[%s284 + $0x4] sm:$0xf]
      %v412 = vld [vmem:[%s284 + $0x8] sm:$0xf]
      %v413 = vld [vmem:[%s284 + $0xc] sm:$0xf]
      %v414 = vld [vmem:[%s284 + $0x10] sm:$0x3]
      %v447 = vunpack.c.l.b16 %v378
      %v448 = vunpack.c.l.b16 %v379
      %v449 = vunpack.c.l.b16 %v380
      %v450 = vunpack.c.l.b16 %v381
      %v451 = vunpack.c.l.b16 %v382
      %v452 = vunpack.c.l.b16 %v383
      %v453 = vunpack.c.l.b16 %v384
      %v454 = vunpack.c.l.b16 %v385
      %v455 = vunpack.c.l.b16 %v386
      %v456 = vunpack.c.l.b16 %v387
      %v457 = vunpack.c.l.b16 %v388
      %v458 = vunpack.c.l.b16 %v389
      %v459 = vunpack.c.l.b16 %v390
      %v460 = vunpack.c.l.b16 %v391
      %v461 = vunpack.c.l.b16 %v392
      %v462 = vunpack.c.l.b16 %v393
      %v463 = vunpack.c.l.b16 %v394
      %v464 = vunpack.c.l.b16 %v395
      %v465 = vunpack.c.l.b16 %v396
      %v466 = vunpack.c.l.b16 %v397
      %v467 = vunpack.c.l.b16 %v398
      %v468 = vunpack.c.l.b16 %v399
      %v469 = vunpack.c.l.b16 %v400
      %v470 = vunpack.c.l.b16 %v401
      %v471 = vunpack.c.l.b16 %v402
      %v472 = vunpack.c.l.b16 %v403
      %v473 = vunpack.c.l.b16 %v404
      %v474 = vunpack.c.l.b16 %v405
      %v475 = vunpack.c.l.b16 %v406
      %v476 = vunpack.c.l.b16 %v407
      %v477 = vunpack.c.l.b16 %v408
      %v478 = vunpack.c.l.b16 %v409
      %v479 = vpack.c.b16 %v448, %v447
      %v480 = vpack.c.b16 %v450, %v449
      %v481 = vpack.c.b16 %v452, %v451
      %v482 = vpack.c.b16 %v454, %v453
      %v483 = vpack.c.b16 %v456, %v455
      %v484 = vpack.c.b16 %v458, %v457
      %v485 = vpack.c.b16 %v460, %v459
      %v486 = vpack.c.b16 %v462, %v461
      %v487 = vpack.c.b16 %v464, %v463
      %v488 = vpack.c.b16 %v466, %v465
      %v489 = vpack.c.b16 %v468, %v467
      %v490 = vpack.c.b16 %v470, %v469
      %v491 = vpack.c.b16 %v472, %v471
      %v492 = vpack.c.b16 %v474, %v473
      %v493 = vpack.c.b16 %v476, %v475
      %v494 = vpack.c.b16 %v478, %v477
      %v500 = vunpack.c.l.b16 %v410
      %v501 = vunpack.c.l.b16 %v411
      %v502 = vunpack.c.l.b16 %v412
      %v503 = vunpack.c.l.b16 %v413
      %v504 = vunpack.c.l.b16 %v414
      %v505 = vpack.c.b16 %v501, %v500
      %v506 = vpack.c.b16 %v503, %v502
      %v507 = vpack.c.b16 %v504, %v504
      %vm510 = vcmask 293888
      %v512 = vsel %vm510, %v479, 0
      %v515 = vsel %vm510, %v480, 0
      %v518 = vsel %vm510, %v481, 0
      %v521 = vsel %vm510, %v482, 0
      %v524 = vsel %vm510, %v483, 0
      %v527 = vsel %vm510, %v484, 0
      %v530 = vsel %vm510, %v485, 0
      %v533 = vsel %vm510, %v486, 0
      %v536 = vsel %vm510, %v487, 0
      %v539 = vsel %vm510, %v488, 0
      %v542 = vsel %vm510, %v489, 0
      %v545 = vsel %vm510, %v490, 0
      %v548 = vsel %vm510, %v491, 0
      %v551 = vsel %vm510, %v492, 0
      %v554 = vsel %vm510, %v493, 0
      %v557 = vsel %vm510, %v494, 0
      %vm559 = vcmask 1041408
      %v561 = vsel %vm559, %v507, 0
      %563 = vmatprep.subr.bf16.mxu0 0
      %564 = vmatpush1.bf16.msra.mxu0 %v505
      %565 = vmatprep.subr.bf16.mxu0 0
      %566 = vmatpush1.bf16.msra.mxu0 %v506
      %567 = vmatprep.subr.bf16.mxu0 0
      %568 = vmatpush1.bf16.msra.mxu0 %v561
      %569 = vmatprep.subr.bf16.mxu0 0
      %570 = vmatpush1.bf16.msra.mxu0 0
      %571 = vmatprep.subr.bf16.mxu0 0
      %572 = vmatpush1.bf16.msra.mxu0 0
      %573 = vmatprep.subr.bf16.mxu0 0
      %574 = vmatpush1.bf16.msra.mxu0 0
      %575 = vmatprep.subr.bf16.mxu0 0
      %576 = vmatpush1.bf16.msra.mxu0 0
      %577 = vmatprep.subr.bf16.mxu0 0
      %578 = vmatpush1.bf16.msra.mxu0 0
      %579 = vmatprep.subr.bf16.mxu0 0
      %580 = vmatpush1.bf16.msra.mxu0 0
      %581 = vmatprep.subr.bf16.mxu0 0
      %582 = vmatpush1.bf16.msra.mxu0 0
      %583 = vmatprep.subr.bf16.mxu0 0
      %584 = vmatpush1.bf16.msra.mxu0 0
      %585 = vmatprep.subr.bf16.mxu0 0
      %586 = vmatpush1.bf16.msra.mxu0 0
      %587 = vmatprep.subr.bf16.mxu0 0
      %588 = vmatpush1.bf16.msra.mxu0 0
      %589 = vmatprep.subr.bf16.mxu0 0
      %590 = vmatpush1.bf16.msra.mxu0 0
      %591 = vmatprep.subr.bf16.mxu0 0
      %592 = vmatpush1.bf16.msra.mxu0 0
      %593 = vmatprep.subr.bf16.mxu0 0
      %594 = vmatpush1.bf16.msra.mxu0 0
      %595 = vmatprep.mubr.bf16.mxu0 0
      %596 = vmatmul.mubr.bf16.gmra.mrb[0].mxu0 %v512
      %v597 = vpop.f32.mrb[0].mxu0
      %v598 = vadd.f32 0.0, %v597
      %v599 = vpop.f32.mrb[0].mxu0
      %v600 = vpop.f32.mrb[0].mxu0
      %v601 = vadd.f32 0.0, %v600
      %v602 = vpop.f32.mrb[0].mxu0
      %603 = vmatprep.mubr.bf16.mxu0 0
      %604 = vmatmul.mubr.bf16.gmra.mrb[0].mxu0 %v515
      %v605 = vpop.f32.mrb[0].mxu0
      %v606 = vadd.f32 0.0, %v605
      %v607 = vpop.f32.mrb[0].mxu0
      %v608 = vpop.f32.mrb[0].mxu0
      %v609 = vadd.f32 0.0, %v608
      %v610 = vpop.f32.mrb[0].mxu0
      %611 = vmatprep.mubr.bf16.mxu0 0
      %612 = vmatmul.mubr.bf16.gmra.mrb[0].mxu0 %v518
      %v613 = vpop.f32.mrb[0].mxu0
      %v614 = vadd.f32 0.0, %v613
      %v615 = vpop.f32.mrb[0].mxu0
      %v616 = vpop.f32.mrb[0].mxu0
      %v617 = vadd.f32 0.0, %v616
      %v618 = vpop.f32.mrb[0].mxu0
      %619 = vmatprep.mubr.bf16.mxu0 0
      %620 = vmatmul.mubr.bf16.gmra.mrb[0].mxu0 %v521
      %v621 = vpop.f32.mrb[0].mxu0
      %v622 = vadd.f32 0.0, %v621
      %v623 = vpop.f32.mrb[0].mxu0
      %v624 = vpop.f32.mrb[0].mxu0
      %v625 = vadd.f32 0.0, %v624
      %v626 = vpop.f32.mrb[0].mxu0
      %627 = vmatprep.mubr.bf16.mxu0 0
      %628 = vmatmul.mubr.bf16.gmra.mrb[0].mxu0 %v524
      %v629 = vpop.f32.mrb[0].mxu0
      %v630 = vadd.f32 0.0, %v629
      %v631 = vpop.f32.mrb[0].mxu0
      %v632 = vpop.f32.mrb[0].mxu0
      %v633 = vadd.f32 0.0, %v632
      %v634 = vpop.f32.mrb[0].mxu0
      %635 = vmatprep.mubr.bf16.mxu0 0
      %636 = vmatmul.mubr.bf16.gmra.mrb[0].mxu0 %v527
      %v637 = vpop.f32.mrb[0].mxu0
      %v638 = vadd.f32 0.0, %v637
      %v639 = vpop.f32.mrb[0].mxu0
      %v640 = vpop.f32.mrb[0].mxu0
      %v641 = vadd.f32 0.0, %v640
      %v642 = vpop.f32.mrb[0].mxu0
      %643 = vmatprep.mubr.bf16.mxu0 0
      %644 = vmatmul.mubr.bf16.gmra.mrb[0].mxu0 %v530
      %v645 = vpop.f32.mrb[0].mxu0
      %v646 = vadd.f32 0.0, %v645
      %v647 = vpop.f32.mrb[0].mxu0
      %v648 = vpop.f32.mrb[0].mxu0
      %v649 = vadd.f32 0.0, %v648
      %v650 = vpop.f32.mrb[0].mxu0
      %651 = vmatprep.mubr.bf16.mxu0 0
      %652 = vmatmul.mubr.bf16.gmra.mrb[0].mxu0 %v533
      %v653 = vpop.f32.mrb[0].mxu0
      %v654 = vadd.f32 0.0, %v653
      %v655 = vpop.f32.mrb[0].mxu0
      %v656 = vpop.f32.mrb[0].mxu0
      %v657 = vadd.f32 0.0, %v656
      %v658 = vpop.f32.mrb[0].mxu0
      %659 = vmatprep.mubr.bf16.mxu0 0
      %660 = vmatmul.mubr.bf16.gmra.mrb[0].mxu0 %v536
      %v661 = vpop.f32.mrb[0].mxu0
      %v662 = vadd.f32 0.0, %v661
      %v663 = vpop.f32.mrb[0].mxu0
      %v664 = vpop.f32.mrb[0].mxu0
      %v665 = vadd.f32 0.0, %v664
      %v666 = vpop.f32.mrb[0].mxu0
      %667 = vmatprep.mubr.bf16.mxu0 0
      %668 = vmatmul.mubr.bf16.gmra.mrb[0].mxu0 %v539
      %v669 = vpop.f32.mrb[0].mxu0
      %v670 = vadd.f32 0.0, %v669
      %v671 = vpop.f32.mrb[0].mxu0
      %v672 = vpop.f32.mrb[0].mxu0
      %v673 = vadd.f32 0.0, %v672
      %v674 = vpop.f32.mrb[0].mxu0
      %675 = vmatprep.mubr.bf16.mxu0 0
      %676 = vmatmul.mubr.bf16.gmra.mrb[0].mxu0 %v542
      %v677 = vpop.f32.mrb[0].mxu0
      %v678 = vadd.f32 0.0, %v677
      %v679 = vpop.f32.mrb[0].mxu0
      %v680 = vpop.f32.mrb[0].mxu0
      %v681 = vadd.f32 0.0, %v680
      %v682 = vpop.f32.mrb[0].mxu0
      %683 = vmatprep.mubr.bf16.mxu0 0
      %684 = vmatmul.mubr.bf16.gmra.mrb[0].mxu0 %v545
      %v685 = vpop.f32.mrb[0].mxu0
      %v686 = vadd.f32 0.0, %v685
      %v687 = vpop.f32.mrb[0].mxu0
      %v688 = vpop.f32.mrb[0].mxu0
      %v689 = vadd.f32 0.0, %v688
      %v690 = vpop.f32.mrb[0].mxu0
      %691 = vmatprep.mubr.bf16.mxu0 0
      %692 = vmatmul.mubr.bf16.gmra.mrb[0].mxu0 %v548
      %v693 = vpop.f32.mrb[0].mxu0
      %v694 = vadd.f32 0.0, %v693
      %v695 = vpop.f32.mrb[0].mxu0
      %v696 = vpop.f32.mrb[0].mxu0
      %v697 = vadd.f32 0.0, %v696
      %v698 = vpop.f32.mrb[0].mxu0
      %699 = vmatprep.mubr.bf16.mxu0 0
      %700 = vmatmul.mubr.bf16.gmra.mrb[0].mxu0 %v551
      %v701 = vpop.f32.mrb[0].mxu0
      %v702 = vadd.f32 0.0, %v701
      %v703 = vpop.f32.mrb[0].mxu0
      %v704 = vpop.f32.mrb[0].mxu0
      %v705 = vadd.f32 0.0, %v704
      %v706 = vpop.f32.mrb[0].mxu0
      %707 = vmatprep.mubr.bf16.mxu0 0
      %708 = vmatmul.mubr.bf16.gmra.mrb[0].mxu0 %v554
      %v709 = vpop.f32.mrb[0].mxu0
      %v710 = vadd.f32 0.0, %v709
      %v711 = vpop.f32.mrb[0].mxu0
      %v712 = vpop.f32.mrb[0].mxu0
      %v713 = vadd.f32 0.0, %v712
      %v714 = vpop.f32.mrb[0].mxu0
      %715 = vmatprep.mubr.bf16.mxu0 0
      %716 = vmatmul.mubr.bf16.gmra.mrb[0].mxu0 %v557
      %v717 = vpop.f32.mrb[0].mxu0
      %v718 = vadd.f32 0.0, %v717
      %v719 = vpop.f32.mrb[0].mxu0
      %v720 = vpop.f32.mrb[0].mxu0
      %v721 = vadd.f32 0.0, %v720
      %v722 = vpop.f32.mrb[0].mxu0
      %723 = vdwg.mxu0
      %v724 = vadd.f32 %v346, %v598
      %v725 = vadd.f32 %v347, %v601
      %v726 = vadd.f32 %v348, %v606
      %v727 = vadd.f32 %v349, %v609
      %v728 = vadd.f32 %v350, %v614
      %v729 = vadd.f32 %v351, %v617
      %v730 = vadd.f32 %v352, %v622
      %v731 = vadd.f32 %v353, %v625
      %v732 = vadd.f32 %v354, %v630
      %v733 = vadd.f32 %v355, %v633
      %v734 = vadd.f32 %v356, %v638
      %v735 = vadd.f32 %v357, %v641
      %v736 = vadd.f32 %v358, %v646
      %v737 = vadd.f32 %v359, %v649
      %v738 = vadd.f32 %v360, %v654
      %v739 = vadd.f32 %v361, %v657
      %v740 = vadd.f32 %v362, %v662
      %v741 = vadd.f32 %v363, %v665
      %v742 = vadd.f32 %v364, %v670
      %v743 = vadd.f32 %v365, %v673
      %v744 = vadd.f32 %v366, %v678
      %v745 = vadd.f32 %v367, %v681
      %v746 = vadd.f32 %v368, %v686
      %v747 = vadd.f32 %v369, %v689
      %v748 = vadd.f32 %v370, %v694
      %v749 = vadd.f32 %v371, %v697
      %v750 = vadd.f32 %v372, %v702
      %v751 = vadd.f32 %v373, %v705
      %v752 = vadd.f32 %v374, %v710
      %v753 = vadd.f32 %v375, %v713
      %v754 = vadd.f32 %v376, %v718
      %v755 = vadd.f32 %v377, %v721
      %756 = vst [vmem:[#allocation2] sm:$0xff] %v724
      %757 = vst [vmem:[#allocation2 + $0x8] sm:$0xff] %v725
      %758 = vst [vmem:[#allocation2 + $0x10] sm:$0xff] %v726
      %759 = vst [vmem:[#allocation2 + $0x18] sm:$0xff] %v727
      %760 = vst [vmem:[#allocation2 + $0x20] sm:$0xff] %v728
      %761 = vst [vmem:[#allocation2 + $0x28] sm:$0xff] %v729
      %762 = vst [vmem:[#allocation2 + $0x30] sm:$0xff] %v730
      %763 = vst [vmem:[#allocation2 + $0x38] sm:$0xff] %v731
      %764 = vst [vmem:[#allocation2 + $0x40] sm:$0xff] %v732
      %765 = vst [vmem:[#allocation2 + $0x48] sm:$0xff] %v733
      %766 = vst [vmem:[#allocation2 + $0x50] sm:$0xff] %v734
      %767 = vst [vmem:[#allocation2 + $0x58] sm:$0xff] %v735
      %768 = vst [vmem:[#allocation2 + $0x60] sm:$0xff] %v736
      %769 = vst [vmem:[#allocation2 + $0x68] sm:$0xff] %v737
      %770 = vst [vmem:[#allocation2 + $0x70] sm:$0xff] %v738
      %771 = vst [vmem:[#allocation2 + $0x78] sm:$0xff] %v739
      %772 = vst [vmem:[#allocation2 + $0x80] sm:$0xff] %v740
      %773 = vst [vmem:[#allocation2 + $0x88] sm:$0xff] %v741
      %774 = vst [vmem:[#allocation2 + $0x90] sm:$0xff] %v742
      %775 = vst [vmem:[#allocation2 + $0x98] sm:$0xff] %v743
      %776 = vst [vmem:[#allocation2 + $0xa0] sm:$0xff] %v744
      %777 = vst [vmem:[#allocation2 + $0xa8] sm:$0xff] %v745
      %778 = vst [vmem:[#allocation2 + $0xb0] sm:$0xff] %v746
      %779 = vst [vmem:[#allocation2 + $0xb8] sm:$0xff] %v747
      %780 = vst [vmem:[#allocation2 + $0xc0] sm:$0xff] %v748
      %781 = vst [vmem:[#allocation2 + $0xc8] sm:$0xff] %v749
      %782 = vst [vmem:[#allocation2 + $0xd0] sm:$0xff] %v750
      %783 = vst [vmem:[#allocation2 + $0xd8] sm:$0xff] %v751
      %784 = vst [vmem:[#allocation2 + $0xe0] sm:$0xff] %v752
      %785 = vst [vmem:[#allocation2 + $0xe8] sm:$0xff] %v753
      %786 = vst [vmem:[#allocation2 + $0xf0] sm:$0xff] %v754
      %787 = vst [vmem:[#allocation2 + $0xf8] sm:$0xff] %v755
      // Predicated region
      $region33: #{conv_bn_act.1} parent=27 // pred_check
        %p788 = pneg %p310
      $region34: #{conv_bn_act.1} parent=27 // pred_check_branch
        %790 = sbr.rel (%p788) target = $region36
      $region35: #{conv_bn_act.1} parent=27 // pred_region
        %v791 = vld [vmem:[#allocation2] sm:$0xff]
        %v792 = vld [vmem:[#allocation2 + $0x8] sm:$0xff]
        %v793 = vld [vmem:[#allocation2 + $0x10] sm:$0xff]
        %v794 = vld [vmem:[#allocation2 + $0x18] sm:$0xff]
        %v795 = vld [vmem:[#allocation2 + $0x20] sm:$0xff]
        %v796 = vld [vmem:[#allocation2 + $0x28] sm:$0xff]
        %v797 = vld [vmem:[#allocation2 + $0x30] sm:$0xff]
        %v798 = vld [vmem:[#allocation2 + $0x38] sm:$0xff]
        %v799 = vld [vmem:[#allocation2 + $0x40] sm:$0xff]
        %v800 = vld [vmem:[#allocation2 + $0x48] sm:$0xff]
        %v801 = vld [vmem:[#allocation2 + $0x50] sm:$0xff]
        %v802 = vld [vmem:[#allocation2 + $0x58] sm:$0xff]
        %v803 = vld [vmem:[#allocation2 + $0x60] sm:$0xff]
        %v804 = vld [vmem:[#allocation2 + $0x68] sm:$0xff]
        %v805 = vld [vmem:[#allocation2 + $0x70] sm:$0xff]
        %v806 = vld [vmem:[#allocation2 + $0x78] sm:$0xff]
        %v807 = vld [vmem:[#allocation2 + $0x80] sm:$0xff]
        %v808 = vld [vmem:[#allocation2 + $0x88] sm:$0xff]
        %v809 = vld [vmem:[#allocation2 + $0x90] sm:$0xff]
        %v810 = vld [vmem:[#allocation2 + $0x98] sm:$0xff]
        %v811 = vld [vmem:[#allocation2 + $0xa0] sm:$0xff]
        %v812 = vld [vmem:[#allocation2 + $0xa8] sm:$0xff]
        %v813 = vld [vmem:[#allocation2 + $0xb0] sm:$0xff]
        %v814 = vld [vmem:[#allocation2 + $0xb8] sm:$0xff]
        %v815 = vld [vmem:[#allocation2 + $0xc0] sm:$0xff]
        %v816 = vld [vmem:[#allocation2 + $0xc8] sm:$0xff]
        %v817 = vld [vmem:[#allocation2 + $0xd0] sm:$0xff]
        %v818 = vld [vmem:[#allocation2 + $0xd8] sm:$0xff]
        %v819 = vld [vmem:[#allocation2 + $0xe0] sm:$0xff]
        %v820 = vld [vmem:[#allocation2 + $0xe8] sm:$0xff]
        %v821 = vld [vmem:[#allocation2 + $0xf0] sm:$0xff]
        %v822 = vld [vmem:[#allocation2 + $0xf8] sm:$0xff]
        %v823 = vpack.c.bf16 %v792, %v791
        %v824 = vpack.c.bf16 %v794, %v793
        %v825 = vpack.c.bf16 %v796, %v795
        %v826 = vpack.c.bf16 %v798, %v797
        %v827 = vpack.c.bf16 %v800, %v799
        %v828 = vpack.c.bf16 %v802, %v801
        %v829 = vpack.c.bf16 %v804, %v803
        %v830 = vpack.c.bf16 %v806, %v805
        %v831 = vpack.c.bf16 %v808, %v807
        %v832 = vpack.c.bf16 %v810, %v809
        %v833 = vpack.c.bf16 %v812, %v811
        %v834 = vpack.c.bf16 %v814, %v813
        %v835 = vpack.c.bf16 %v816, %v815
        %v836 = vpack.c.bf16 %v818, %v817
        %v837 = vpack.c.bf16 %v820, %v819
        %v838 = vpack.c.bf16 %v822, %v821
        %v855 = vunpack.c.l.b16 %v823
        %v856 = vunpack.c.h.b16 %v823
        %v857 = vunpack.c.l.b16 %v824
        %v858 = vunpack.c.h.b16 %v824
        %v859 = vunpack.c.l.b16 %v825
        %v860 = vunpack.c.h.b16 %v825
        %v861 = vunpack.c.l.b16 %v826
        %v862 = vunpack.c.h.b16 %v826
        %v863 = vunpack.c.l.b16 %v827
        %v864 = vunpack.c.h.b16 %v827
        %v865 = vunpack.c.l.b16 %v828
        %v866 = vunpack.c.h.b16 %v828
        %v867 = vunpack.c.l.b16 %v829
        %v868 = vunpack.c.h.b16 %v829
        %v869 = vunpack.c.l.b16 %v830
        %v870 = vunpack.c.h.b16 %v830
        %v871 = vunpack.c.l.b16 %v831
        %v872 = vunpack.c.h.b16 %v831
        %v873 = vunpack.c.l.b16 %v832
        %v874 = vunpack.c.h.b16 %v832
        %v875 = vunpack.c.l.b16 %v833
        %v876 = vunpack.c.h.b16 %v833
        %v877 = vunpack.c.l.b16 %v834
        %v878 = vunpack.c.h.b16 %v834
        %v879 = vunpack.c.l.b16 %v835
        %v880 = vunpack.c.h.b16 %v835
        %v881 = vunpack.c.l.b16 %v836
        %v882 = vunpack.c.h.b16 %v836
        %v883 = vunpack.c.l.b16 %v837
        %v884 = vunpack.c.h.b16 %v837
        %v885 = vunpack.c.l.b16 %v838
        %v886 = vunpack.c.h.b16 %v838
        %v887 = vpack.c.b16 %v855, %v855
        %v888 = vpack.c.b16 %v856, %v856
        %v889 = vpack.c.b16 %v857, %v857
        %v890 = vpack.c.b16 %v858, %v858
        %v891 = vpack.c.b16 %v859, %v859
        %v892 = vpack.c.b16 %v860, %v860
        %v893 = vpack.c.b16 %v861, %v861
        %v894 = vpack.c.b16 %v862, %v862
        %v895 = vpack.c.b16 %v863, %v863
        %v896 = vpack.c.b16 %v864, %v864
        %v897 = vpack.c.b16 %v865, %v865
        %v898 = vpack.c.b16 %v866, %v866
        %v899 = vpack.c.b16 %v867, %v867
        %v900 = vpack.c.b16 %v868, %v868
        %v901 = vpack.c.b16 %v869, %v869
        %v902 = vpack.c.b16 %v870, %v870
        %v903 = vpack.c.b16 %v871, %v871
        %v904 = vpack.c.b16 %v872, %v872
        %v905 = vpack.c.b16 %v873, %v873
        %v906 = vpack.c.b16 %v874, %v874
        %v907 = vpack.c.b16 %v875, %v875
        %v908 = vpack.c.b16 %v876, %v876
        %v909 = vpack.c.b16 %v877, %v877
        %v910 = vpack.c.b16 %v878, %v878
        %v911 = vpack.c.b16 %v879, %v879
        %v912 = vpack.c.b16 %v880, %v880
        %v913 = vpack.c.b16 %v881, %v881
        %v914 = vpack.c.b16 %v882, %v882
        %v915 = vpack.c.b16 %v883, %v883
        %v916 = vpack.c.b16 %v884, %v884
        %v917 = vpack.c.b16 %v885, %v885
        %v918 = vpack.c.b16 %v886, %v886
        %vm951 = vcmask 60416
        %952 = vst.msk [vmem:[%s293] sm:$0xf] %vm951, %v887
        %953 = vst.msk [vmem:[%s293 + $0x4] sm:$0xf] %vm951, %v888
        %954 = vst.msk [vmem:[%s293 + $0x8] sm:$0xf] %vm951, %v889
        %955 = vst.msk [vmem:[%s293 + $0xc] sm:$0xf] %vm951, %v890
        %956 = vst.msk [vmem:[%s293 + $0x10] sm:$0xf] %vm951, %v891
        %957 = vst.msk [vmem:[%s293 + $0x14] sm:$0xf] %vm951, %v892
        %958 = vst.msk [vmem:[%s293 + $0x18] sm:$0xf] %vm951, %v893
        %959 = vst.msk [vmem:[%s293 + $0x1c] sm:$0xf] %vm951, %v894
        %960 = vst.msk [vmem:[%s293 + $0x20] sm:$0xf] %vm951, %v895
        %961 = vst.msk [vmem:[%s293 + $0x24] sm:$0xf] %vm951, %v896
        %962 = vst.msk [vmem:[%s293 + $0x28] sm:$0xf] %vm951, %v897
        %963 = vst.msk [vmem:[%s293 + $0x2c] sm:$0xf] %vm951, %v898
        %964 = vst.msk [vmem:[%s293 + $0x30] sm:$0xf] %vm951, %v899
        %965 = vst.msk [vmem:[%s293 + $0x34] sm:$0xf] %vm951, %v900
        %966 = vst.msk [vmem:[%s293 + $0x38] sm:$0xf] %vm951, %v901
        %967 = vst.msk [vmem:[%s293 + $0x3c] sm:$0xf] %vm951, %v902
        %968 = vst.msk [vmem:[%s293 + $0x40] sm:$0xf] %vm951, %v903
        %969 = vst.msk [vmem:[%s293 + $0x44] sm:$0xf] %vm951, %v904
        %970 = vst.msk [vmem:[%s293 + $0x48] sm:$0xf] %vm951, %v905
        %971 = vst.msk [vmem:[%s293 + $0x4c] sm:$0xf] %vm951, %v906
        %972 = vst.msk [vmem:[%s293 + $0x50] sm:$0xf] %vm951, %v907
        %973 = vst.msk [vmem:[%s293 + $0x54] sm:$0xf] %vm951, %v908
        %974 = vst.msk [vmem:[%s293 + $0x58] sm:$0xf] %vm951, %v909
        %975 = vst.msk [vmem:[%s293 + $0x5c] sm:$0xf] %vm951, %v910
        %976 = vst.msk [vmem:[%s293 + $0x60] sm:$0xf] %vm951, %v911
        %977 = vst.msk [vmem:[%s293 + $0x64] sm:$0xf] %vm951, %v912
        %978 = vst.msk [vmem:[%s293 + $0x68] sm:$0xf] %vm951, %v913
        %979 = vst.msk [vmem:[%s293 + $0x6c] sm:$0xf] %vm951, %v914
        %980 = vst.msk [vmem:[%s293 + $0x70] sm:$0xf] %vm951, %v915
        %981 = vst.msk [vmem:[%s293 + $0x74] sm:$0xf] %vm951, %v916
        %982 = vst.msk [vmem:[%s293 + $0x78] sm:$0xf] %vm951, %v917
        %983 = vst.msk [vmem:[%s293 + $0x7c] sm:$0xf] %vm951, %v918
        %v984 = vadd.f32 %v791, %v792
        %v985 = vadd.f32 %v984, %v793
        %v986 = vadd.f32 %v985, %v794
        %v987 = vadd.f32 %v986, %v795
        %v988 = vadd.f32 %v987, %v796
        %v989 = vadd.f32 %v988, %v797
        %v990 = vadd.f32 %v989, %v798
        %v991 = vadd.f32 %v990, %v799
        %v992 = vadd.f32 %v991, %v800
        %v993 = vadd.f32 %v992, %v801
        %v994 = vadd.f32 %v993, %v802
        %v995 = vadd.f32 %v994, %v803
        %v996 = vadd.f32 %v995, %v804
        %v997 = vadd.f32 %v996, %v805
        %v998 = vadd.f32 %v997, %v806
        %v999 = vadd.f32 %v998, %v807
        %v1000 = vadd.f32 %v999, %v808
        %v1001 = vadd.f32 %v1000, %v809
        %v1002 = vadd.f32 %v1001, %v810
        %v1003 = vadd.f32 %v1002, %v811
        %v1004 = vadd.f32 %v1003, %v812
        %v1005 = vadd.f32 %v1004, %v813
        %v1006 = vadd.f32 %v1005, %v814
        %v1007 = vadd.f32 %v1006, %v815
        %v1008 = vadd.f32 %v1007, %v816
        %v1009 = vadd.f32 %v1008, %v817
        %v1010 = vadd.f32 %v1009, %v818
        %v1011 = vadd.f32 %v1010, %v819
        %v1012 = vadd.f32 %v1011, %v820
        %v1013 = vadd.f32 %v1012, %v821
        %v1014 = vadd.f32 %v1013, %v822
        %1015 = vst [vmem:[%s301] sm:$0xff] %v1014
        %v1016 = vmul.f32 %v791, %v791
        %v1017 = vmul.f32 %v792, %v792
        %v1018 = vmul.f32 %v793, %v793
        %v1019 = vmul.f32 %v794, %v794
        %v1020 = vmul.f32 %v795, %v795
        %v1021 = vmul.f32 %v796, %v796
        %v1022 = vmul.f32 %v797, %v797
        %v1023 = vmul.f32 %v798, %v798
        %v1024 = vmul.f32 %v799, %v799
        %v1025 = vmul.f32 %v800, %v800
        %v1026 = vmul.f32 %v801, %v801
        %v1027 = vmul.f32 %v802, %v802
        %v1028 = vmul.f32 %v803, %v803
        %v1029 = vmul.f32 %v804, %v804
        %v1030 = vmul.f32 %v805, %v805
        %v1031 = vmul.f32 %v806, %v806
        %v1032 = vmul.f32 %v807, %v807
        %v1033 = vmul.f32 %v808, %v808
        %v1034 = vmul.f32 %v809, %v809
        %v1035 = vmul.f32 %v810, %v810
        %v1036 = vmul.f32 %v811, %v811
        %v1037 = vmul.f32 %v812, %v812
        %v1038 = vmul.f32 %v813, %v813
        %v1039 = vmul.f32 %v814, %v814
        %v1040 = vmul.f32 %v815, %v815
        %v1041 = vmul.f32 %v816, %v816
        %v1042 = vmul.f32 %v817, %v817
        %v1043 = vmul.f32 %v818, %v818
        %v1044 = vmul.f32 %v819, %v819
        %v1045 = vmul.f32 %v820, %v820
        %v1046 = vmul.f32 %v821, %v821
        %v1047 = vmul.f32 %v822, %v822
        %v1048 = vadd.f32 %v1016, %v1017
        %v1049 = vadd.f32 %v1048, %v1018
        %v1050 = vadd.f32 %v1049, %v1019
        %v1051 = vadd.f32 %v1050, %v1020
        %v1052 = vadd.f32 %v1051, %v1021
        %v1053 = vadd.f32 %v1052, %v1022
        %v1054 = vadd.f32 %v1053, %v1023
        %v1055 = vadd.f32 %v1054, %v1024
        %v1056 = vadd.f32 %v1055, %v1025
        %v1057 = vadd.f32 %v1056, %v1026
        %v1058 = vadd.f32 %v1057, %v1027
        %v1059 = vadd.f32 %v1058, %v1028
        %v1060 = vadd.f32 %v1059, %v1029
        %v1061 = vadd.f32 %v1060, %v1030
        %v1062 = vadd.f32 %v1061, %v1031
        %v1063 = vadd.f32 %v1062, %v1032
        %v1064 = vadd.f32 %v1063, %v1033
        %v1065 = vadd.f32 %v1064, %v1034
        %v1066 = vadd.f32 %v1065, %v1035
        %v1067 = vadd.f32 %v1066, %v1036
        %v1068 = vadd.f32 %v1067, %v1037
        %v1069 = vadd.f32 %v1068, %v1038
        %v1070 = vadd.f32 %v1069, %v1039
        %v1071 = vadd.f32 %v1070, %v1040
        %v1072 = vadd.f32 %v1071, %v1041
        %v1073 = vadd.f32 %v1072, %v1042
        %v1074 = vadd.f32 %v1073, %v1043
        %v1075 = vadd.f32 %v1074, %v1044
        %v1076 = vadd.f32 %v1075, %v1045
        %v1077 = vadd.f32 %v1076, %v1046
        %v1078 = vadd.f32 %v1077, %v1047
        %1079 = vst [vmem:[%s308] sm:$0xff] %v1078
      $region36: #{conv_bn_act.1} parent=27 // pred_fallthru
        _
      %s1080 = smul.u32 32, %s21
      %p1081 = scmp.lt.s32.totalorder %s1080, 63
      %s1082 = scalar_select %p1081, %s1080, 63
      %p1083 = scmp.lt.s32.totalorder %s22, 0
      %s1084 = scalar_select %p1083, %s22, 0
      %s1085 = sadd.s32 %s1084, %s1082
      %s1086 = smul.addr %s1085, 4
      %s1087 = scalar_lea.vmem %s2, %s1086
      %p1088 = scmp.lt.s32.totalorder %s21, 1
      %s1089 = scalar_select %p1088, %s21, 1
      %p1090 = scmp.lt.s32.totalorder %s22, 0
      %s1091 = scalar_select %p1090, %s22, 0
      %s1092 = sadd.s32 %s1091, %s1089
      %s1093 = smul.addr %s1092, 8
      %s1094 = scalar_lea.vmem %s3, %s1093
      %p1095 = scmp.lt.s32.totalorder %s21, 1
      %s1096 = scalar_select %p1095, %s21, 1
      %p1097 = scmp.lt.s32.totalorder %s22, 0
      %s1098 = scalar_select %p1097, %s22, 0
      %s1099 = sadd.s32 %s1098, %s1096
      %s1100 = smul.addr %s1099, 8
      %s1101 = scalar_lea.vmem %s4, %s1100
      // Predicated region
      $region37: #{conv_bn_act.1} parent=27 // pred_check
        %p1102 = pneg %p111
      $region38: #{conv_bn_act.1} parent=27 // pred_check_branch
        %1104 = sbr.rel (%p1102) target = $region40
      $region39: #{conv_bn_act.1} parent=27 // pred_region
        %s1105 = smul.u32 32, %s21
      $region40: #{conv_bn_act.1} parent=27 // pred_fallthru
        _
      // Predicated region
      $region41: #{conv_bn_act.1} parent=27 // pred_check
        %p1106 = pneg %p139
      $region42: #{conv_bn_act.1} parent=27 // pred_check_branch
        %1108 = sbr.rel (%p1106) target = $region44
      $region43: #{conv_bn_act.1} parent=27 // pred_region
        _
      $region44: #{conv_bn_act.1} parent=27 // pred_fallthru
        _
      // Predicated region
      $region45: #{conv_bn_act.1} parent=27 // pred_check
        %p1109 = pneg %p167
      $region46: #{conv_bn_act.1} parent=27 // pred_check_branch
        %1111 = sbr.rel (%p1109) target = $region48
      $region47: #{conv_bn_act.1} parent=27 // pred_region
        _
      $region48: #{conv_bn_act.1} parent=27 // pred_fallthru
        _
    $region28: #{conv_bn_act.1} parent=5 // pred_fallthru
      _
    %p1112 = scmp.le.s32.totalorder 2, %s11
    // Predicated region
    $region49: #{conv_bn_act.1} parent=5 // pred_check
      %p1113 = pneg %p1112
    $region50: #{conv_bn_act.1} parent=5 // pred_check_branch
      %1115 = sbr.rel (%p1113) target = $region52
    $region51: #{conv_bn_act.1} parent=5 // pred_region
      %s1116 = ssub.s32 %s11, 2
      // Predicated region
      $region53: #{conv_bn_act.1} parent=51 // pred_check
        %p1117 = pneg %p117
      $region54: #{conv_bn_act.1} parent=51 // pred_check_branch
        %1119 = sbr.rel (%p1117) target = $region56
      $region55: #{conv_bn_act.1} parent=51 // pred_region
        %s1120 = smul.u32 32, %s24
        %p1121 = scmp.lt.s32.totalorder %s1120, 63
        %s1122 = scalar_select %p1121, %s1120, 63
        %p1123 = scmp.lt.s32.totalorder %s25, 0
        %s1124 = scalar_select %p1123, %s25, 0
        %s1125 = sadd.s32 %s1124, %s1122
        %s1126 = smul.addr %s1125, 4
        %s1127 = scalar_lea.vmem %s2, %s1126
      $region56: #{conv_bn_act.1} parent=51 // pred_fallthru
        _
      // Predicated region
      $region57: #{conv_bn_act.1} parent=51 // pred_check
        %p1128 = pneg %p145
      $region58: #{conv_bn_act.1} parent=51 // pred_check_branch
        %1130 = sbr.rel (%p1128) target = $region60
      $region59: #{conv_bn_act.1} parent=51 // pred_region
        %p1131 = scmp.lt.s32.totalorder %s24, 1
        %s1132 = scalar_select %p1131, %s24, 1
        %p1133 = scmp.lt.s32.totalorder %s25, 0
        %s1134 = scalar_select %p1133, %s25, 0
        %s1135 = sadd.s32 %s1134, %s1132
        %s1136 = smul.addr %s1135, 8
        %s1137 = scalar_lea.vmem %s3, %s1136
      $region60: #{conv_bn_act.1} parent=51 // pred_fallthru
        _
      // Predicated region
      $region61: #{conv_bn_act.1} parent=51 // pred_check
        %p1138 = pneg %p173
      $region62: #{conv_bn_act.1} parent=51 // pred_check_branch
        %1140 = sbr.rel (%p1138) target = $region64
      $region63: #{conv_bn_act.1} parent=51 // pred_region
        %p1141 = scmp.lt.s32.totalorder %s24, 1
        %s1142 = scalar_select %p1141, %s24, 1
        %p1143 = scmp.lt.s32.totalorder %s25, 0
        %s1144 = scalar_select %p1143, %s25, 0
        %s1145 = sadd.s32 %s1144, %s1142
        %s1146 = smul.addr %s1145, 8
        %s1147 = scalar_lea.vmem %s4, %s1146
      $region64: #{conv_bn_act.1} parent=51 // pred_fallthru
        _
    $region52: #{conv_bn_act.1} parent=5 // pred_fallthru
      _
  $region6: #{conv_bn_act.1} parent=0 // loop_footer
    %s15 = sadd.s32 1, %s11
  $region7: #{conv_bn_act.1} parent=0 // loop_footer_branch
    %10 = sbr.rel target = $region3
  $region8: #{conv_bn_act.1} parent=0 // loop_exit
    _

</llo_original>
